<compile_context>
chip_gen: v5e
topology: v5e:2x2
jax: 0.10.0
libtpu: 0.0.40
codegen_flags: <defaults>
</compile_context>

<pallas_src>
import functools

import jax
import jax.numpy as jnp
from jax.experimental import pallas as pl
from jax.experimental.pallas import tpu as pltpu

REPARAM_NOISE = 1e-6


def _round_up(x, m):
    return (x + m - 1) // m * m


def _actor_kernel(x_ref, w1_ref, b1_ref, w2_ref, b2_ref, wh_ref, bh_ref,
                  out_ref, *, n_actions):
    # Feature-major layout: features on sublanes, batch on lanes.
    x = x_ref[...].astype(jnp.float32)                         # (input_dims, bm)

    if x_ref.shape[0] == 1:
        # Degenerate K=1 fc1: VPU outer product (stride-0 sublane broadcast of
        # the lane-dense state row) instead of a wasteful MXU pass.
        h1 = (w1_ref[...].astype(jnp.float32) * x
              + b1_ref[...].astype(jnp.float32))               # (fc1, bm)
    else:
        h1 = (jnp.dot(w1_ref[...], x.astype(w1_ref.dtype),
                      preferred_element_type=jnp.float32)
              + b1_ref[...].astype(jnp.float32))
    h1 = jnp.maximum(h1, 0.0)

    # fc2 + relu (MXU, f32 accumulation).
    h2 = (jnp.dot(w2_ref[...], h1.astype(w2_ref.dtype),
                  preferred_element_type=jnp.float32)
          + b2_ref[...].astype(jnp.float32))                   # (fc2, bm)
    h2 = jnp.maximum(h2, 0.0)

    # Fused mu|sigma head: one small-M matmul into an (8, bm) lane-dense slab.
    heads = (jnp.dot(wh_ref[...], h2.astype(wh_ref.dtype),
                     preferred_element_type=jnp.float32)
             + bh_ref[...].astype(jnp.float32))                # (head_rows, bm)

    # Rows [0, n_actions) are mu; everything else (sigma + pad rows) is
    # clamped.  Pad rows are discarded by the wrapper slice, so no upper
    # bound check is needed.
    row = jax.lax.broadcasted_iota(jnp.int32, heads.shape, 0)
    out_ref[...] = jnp.where(row >= n_actions,
                             jnp.clip(heads, REPARAM_NOISE, 1.0),
                             heads).astype(out_ref.dtype)


def pack_params(params, compute_dtype=jnp.float32):
    """Transpose to feature-major and pack the mu|sigma heads into one matmul.

    compute_dtype=jnp.bfloat16 is recommended on v6e/v7x (halves weight DMA /
    residency, runs the 256-wide MXU at full rate; f32 accumulation is kept
    in-kernel).  Keep f32 on v5e.  W1 stays f32 when input_dims == 1 because
    that layer runs on the VPU.
    """
    w1, b1, w2, b2, wmu, bmu, wsig, bsig = params
    input_dims = w1.shape[0]
    n_actions = wmu.shape[1]
    head_rows = max(8, _round_up(2 * n_actions, 8))
    pad = head_rows - 2 * n_actions

    wht = jnp.pad(jnp.concatenate([wmu, wsig], axis=1).T, ((0, pad), (0, 0)))
    bht = jnp.pad(jnp.concatenate([bmu, bsig], axis=1).T, ((0, pad), (0, 0)))

    w1_dtype = jnp.float32 if input_dims == 1 else compute_dtype
    packed = (w1.T.astype(w1_dtype),            # (fc1, input_dims)
              b1.T.astype(jnp.float32),         # (fc1, 1)
              w2.T.astype(compute_dtype),       # (fc2, fc1)
              b2.T.astype(jnp.float32),         # (fc2, 1)
              wht.astype(compute_dtype),        # (head_rows, fc2)
              bht.astype(jnp.float32))          # (head_rows, 1)
    return packed, n_actions


@functools.partial(jax.jit, static_argnames=("n_actions", "block_m"))
def actor_forward(state, packed_params, n_actions, block_m=1024):
    """Full ActorNetwork forward in one fused Pallas kernel.  state: (batch, input_dims)."""
    w1t, b1t, w2t, b2t, wht, bht = packed_params
    batch, input_dims = state.shape
    fc1 = w1t.shape[0]
    fc2 = w2t.shape[0]
    head_rows = wht.shape[0]

    # Batch lives on the lane axis, so the tile must be a multiple of 128.
    # Pick it to (a) amortize the ~0.35 us/step grid overhead (default 1024,
    # cap 2048 to stay far under every generation's scoped VMEM),
    # (b) minimize padding on awkward batch sizes, and (c) give >= 2 grid
    # steps when there is enough work so both v7x TensorCores are used.
    bm_cap = max(128, min(int(block_m), 2048))
    min_steps = 2 if batch > 128 else 1
    steps = max(min_steps, pl.cdiv(batch, bm_cap))
    bm = _round_up(pl.cdiv(batch, steps), 128)
    padded = _round_up(batch, bm)
    grid = (padded // bm,)

    state_t = state.T                                          # (input_dims, batch)
    if padded != batch:
        state_t = jnp.pad(state_t, ((0, 0), (0, padded - batch)))

    flops = int(2 * padded * (input_dims * fc1 + fc1 * fc2 + fc2 * 2 * n_actions))
    bytes_accessed = int(
        padded * input_dims * 4
        + w1t.size * w1t.dtype.itemsize + b1t.size * 4
        + w2t.size * w2t.dtype.itemsize + b2t.size * 4
        + wht.size * wht.dtype.itemsize + bht.size * 4
        + padded * head_rows * 4)

    kernel = functools.partial(_actor_kernel, n_actions=n_actions)

    out = pl.pallas_call(
        kernel,
        out_shape=jax.ShapeDtypeStruct((head_rows, padded), jnp.float32),
        grid=grid,
        in_specs=[
            pl.BlockSpec((input_dims, bm), lambda i: (0, i)),   # state tile (lane-dense)
            pl.BlockSpec((fc1, input_dims), lambda i: (0, 0)),  # W1^T  (VMEM resident)
            pl.BlockSpec((fc1, 1), lambda i: (0, 0)),           # b1^T
            pl.BlockSpec((fc2, fc1), lambda i: (0, 0)),         # W2^T  (VMEM resident)
            pl.BlockSpec((fc2, 1), lambda i: (0, 0)),           # b2^T
            pl.BlockSpec((head_rows, fc2), lambda i: (0, 0)),   # packed mu|sigma head
            pl.BlockSpec((head_rows, 1), lambda i: (0, 0)),     # packed head bias
        ],
        out_specs=pl.BlockSpec((head_rows, bm), lambda i: (0, i)),
        compiler_params=pltpu.CompilerParams(
            dimension_semantics=("parallel",),
            vmem_limit_bytes=32 * 1024 * 1024),
        cost_estimate=pl.CostEstimate(flops=flops, transcendentals=0,
                                      bytes_accessed=bytes_accessed),
    )(state_t, w1t, b1t, w2t, b2t, wht, bht)

    mu = out[:n_actions, :batch].T
    sigma = out[n_actions:2 * n_actions, :batch].T
    return mu, sigma


def init_params(key, input_dims=1, fc1_dims=256, fc2_dims=256, n_actions=2):
    """PyTorch-style uniform(-1/sqrt(fan_in), 1/sqrt(fan_in)) init."""
    ks = jax.random.split(key, 8)

    def lin(kw, kb, fan_in, fan_out):
        bound = 1.0 / jnp.sqrt(jnp.float32(fan_in))
        w = jax.random.uniform(kw, (fan_in, fan_out), jnp.float32, -bound, bound)
        b = jax.random.uniform(kb, (1, fan_out), jnp.float32, -bound, bound)
        return w, b

    w1, b1 = lin(ks[0], ks[1], input_dims, fc1_dims)
    w2, b2 = lin(ks[2], ks[3], fc1_dims, fc2_dims)
    wmu, bmu = lin(ks[4], ks[5], fc2_dims, n_actions)
    wsig, bsig = lin(ks[6], ks[7], fc2_dims, n_actions)
    return (w1, b1, w2, b2, wmu, bmu, wsig, bsig)


def reference_forward(state, params):
    """Plain-JAX reference for correctness checking."""
    w1, b1, w2, b2, wmu, bmu, wsig, bsig = params
    h1 = jnp.maximum(state @ w1 + b1, 0.0)
    h2 = jnp.maximum(h1 @ w2 + b2, 0.0)
    mu = h2 @ wmu + bmu
    sigma = jnp.clip(h2 @ wsig + bsig, REPARAM_NOISE, 1.0)
    return mu, sigma


if __name__ == "__main__":
    key = jax.random.PRNGKey(0)
    k_params, k_state = jax.random.split(key)

    # Module defaults: input_dims=1, fc1_dims=256, fc2_dims=256, n_actions=2.
    input_dims, fc1_dims, fc2_dims, n_actions = 1, 256, 256, 2
    batch = 8  # NOTE: for real throughput, batch >= 256 rows per call.

    params = init_params(k_params, input_dims, fc1_dims, fc2_dims, n_actions)
    state = jax.random.normal(k_state, (batch, input_dims), jnp.float32)
    mu_ref, sigma_ref = reference_forward(state, params)

    # f32 weights (bitwise-tight path; recommended default on v5e).
    packed_f32, n_act = pack_params(params, compute_dtype=jnp.float32)
    mu, sigma = actor_forward(state, packed_f32, n_act)
    jax.block_until_ready((mu, sigma))
    assert mu.shape == (batch, n_actions) and sigma.shape == (batch, n_actions)
    assert jnp.allclose(mu, mu_ref, atol=1e-5, rtol=1e-5)
    assert jnp.allclose(sigma, sigma_ref, atol=1e-5, rtol=1e-5)
    assert float(jnp.min(sigma)) >= REPARAM_NOISE and float(jnp.max(sigma)) <= 1.0

    # bf16 weight packing (recommended on v6e/v7x): f32 accumulation and the
    # f32 sigma clamp/store are kept in-kernel, so only weight rounding remains.
    packed_bf16, _ = pack_params(params, compute_dtype=jnp.bfloat16)
    mu_b, sigma_b = actor_forward(state, packed_bf16, n_act)
    jax.block_until_ready((mu_b, sigma_b))
    assert jnp.allclose(mu_b, mu_ref, atol=5e-2, rtol=5e-2)
    assert float(jnp.min(sigma_b)) >= REPARAM_NOISE and float(jnp.max(sigma_b)) <= 1.0

    print("KERNEL_OK")
</pallas_src>

<mosaic_0001>
module attributes {stable_mosaic.version = 11 : i64} {
  func.func @_actor_kernel(%arg0: i32, %arg1: memref<1x128xf32, #tpu.memory_space<vmem>>, %arg2: memref<256x1xf32, #tpu.memory_space<vmem>>, %arg3: memref<256x1xf32, #tpu.memory_space<vmem>>, %arg4: memref<256x256xf32, #tpu.memory_space<vmem>>, %arg5: memref<256x1xf32, #tpu.memory_space<vmem>>, %arg6: memref<8x256xf32, #tpu.memory_space<vmem>>, %arg7: memref<8x1xf32, #tpu.memory_space<vmem>>, %arg8: memref<8x128xf32, #tpu.memory_space<vmem>>) attributes {dimension_semantics = [#tpu.dimension_semantics<parallel>], iteration_bounds = array<i64: 1>, scalar_prefetch = 0 : i64, scratch_operands = 0 : i64, tpu.core_type = #tpu.core_type<tc>, window_params = [{transform_indices = @transform_0, window_bounds = array<i64: 1, 128>}, {pipeline_mode = #tpu.pipeline_mode<synchronous>, transform_indices = @transform_1, window_bounds = array<i64: 256, 1>}, {pipeline_mode = #tpu.pipeline_mode<synchronous>, transform_indices = @transform_2, window_bounds = array<i64: 256, 1>}, {pipeline_mode = #tpu.pipeline_mode<synchronous>, transform_indices = @transform_3, window_bounds = array<i64: 256, 256>}, {pipeline_mode = #tpu.pipeline_mode<synchronous>, transform_indices = @transform_4, window_bounds = array<i64: 256, 1>}, {pipeline_mode = #tpu.pipeline_mode<synchronous>, transform_indices = @transform_5, window_bounds = array<i64: 8, 256>}, {pipeline_mode = #tpu.pipeline_mode<synchronous>, transform_indices = @transform_6, window_bounds = array<i64: 8, 1>}, {transform_indices = @transform_7, window_bounds = array<i64: 8, 128>}]} {
    %c0 = arith.constant 0 : index
    %c0_0 = arith.constant 0 : index
    %0 = vector.load %arg1[%c0, %c0_0] : memref<1x128xf32, #tpu.memory_space<vmem>>, vector<1x128xf32>
    %c0_1 = arith.constant 0 : index
    %c0_2 = arith.constant 0 : index
    %1 = vector.load %arg2[%c0_1, %c0_2] : memref<256x1xf32, #tpu.memory_space<vmem>>, vector<256x1xf32>
    %2 = vector.broadcast %1 : vector<256x1xf32> to vector<256x128xf32>
    %3 = vector.broadcast %0 : vector<1x128xf32> to vector<256x128xf32>
    %4 = arith.mulf %2, %3 : vector<256x128xf32>
    %c0_3 = arith.constant 0 : index
    %c0_4 = arith.constant 0 : index
    %5 = vector.load %arg3[%c0_3, %c0_4] : memref<256x1xf32, #tpu.memory_space<vmem>>, vector<256x1xf32>
    %6 = vector.broadcast %5 : vector<256x1xf32> to vector<256x128xf32>
    %7 = arith.addf %4, %6 : vector<256x128xf32>
    %cst = arith.constant 0.000000e+00 : f32
    %8 = vector.broadcast %cst : f32 to vector<256x128xf32>
    %9 = arith.maximumf %7, %8 : vector<256x128xf32>
    %c0_5 = arith.constant 0 : index
    %c0_6 = arith.constant 0 : index
    %10 = vector.load %arg4[%c0_5, %c0_6] : memref<256x256xf32, #tpu.memory_space<vmem>>, vector<256x256xf32>
    %cst_7 = arith.constant dense<0.000000e+00> : vector<256x128xf32>
    %11 = tpu.matmul %10, %9, %cst_7 {dimension_numbers = #tpu.dot_dimension_numbers<[1], [0], [0], [1], [0, 0, 1, 1], [], []>} : vector<256x256xf32>, vector<256x128xf32>, vector<256x128xf32> -> vector<256x128xf32>
    %c0_8 = arith.constant 0 : index
    %c0_9 = arith.constant 0 : index
    %12 = vector.load %arg5[%c0_8, %c0_9] : memref<256x1xf32, #tpu.memory_space<vmem>>, vector<256x1xf32>
    %13 = vector.broadcast %12 : vector<256x1xf32> to vector<256x128xf32>
    %14 = arith.addf %11, %13 : vector<256x128xf32>
    %cst_10 = arith.constant 0.000000e+00 : f32
    %15 = vector.broadcast %cst_10 : f32 to vector<256x128xf32>
    %16 = arith.maximumf %14, %15 : vector<256x128xf32>
    %c0_11 = arith.constant 0 : index
    %c0_12 = arith.constant 0 : index
    %17 = vector.load %arg6[%c0_11, %c0_12] : memref<8x256xf32, #tpu.memory_space<vmem>>, vector<8x256xf32>
    %cst_13 = arith.constant dense<0.000000e+00> : vector<8x128xf32>
    %18 = tpu.matmul %17, %16, %cst_13 {dimension_numbers = #tpu.dot_dimension_numbers<[1], [0], [0], [1], [0, 0, 1, 1], [], []>} : vector<8x256xf32>, vector<256x128xf32>, vector<8x128xf32> -> vector<8x128xf32>
    %c0_14 = arith.constant 0 : index
    %c0_15 = arith.constant 0 : index
    %19 = vector.load %arg7[%c0_14, %c0_15] : memref<8x1xf32, #tpu.memory_space<vmem>>, vector<8x1xf32>
    %20 = vector.broadcast %19 : vector<8x1xf32> to vector<8x128xf32>
    %21 = arith.addf %18, %20 : vector<8x128xf32>
    %22 = tpu.iota {dimensions = array<i32: 0>} : vector<8x128xi32>
    %c2_i32 = arith.constant 2 : i32
    %23 = vector.broadcast %c2_i32 : i32 to vector<8x128xi32>
    %24 = arith.cmpi sge, %22, %23 : vector<8x128xi32>
    %cst_16 = arith.constant 9.99999997E-7 : f32
    %cst_17 = arith.constant 1.000000e+00 : f32
    %25 = vector.broadcast %cst_16 : f32 to vector<8x128xf32>
    %26 = arith.maximumf %25, %21 : vector<8x128xf32>
    %27 = vector.broadcast %cst_17 : f32 to vector<8x128xf32>
    %28 = arith.minimumf %27, %26 : vector<8x128xf32>
    %29 = arith.select %24, %28, %21 : vector<8x128xi1>, vector<8x128xf32>
    %c0_18 = arith.constant 0 : index
    %c0_19 = arith.constant 0 : index
    %30 = vector.load %arg8[%c0_18, %c0_19] : memref<8x128xf32, #tpu.memory_space<vmem>>, vector<8x128xf32>
    tpu.vector_store %arg8[%c0_18, %c0_19], %29 {strides = array<i32>} : memref<8x128xf32, #tpu.memory_space<vmem>>, vector<8x128xf32>,
    return
  }
  func.func @transform_0(%arg0: i32) -> (i32, i32) {
    %c0_i32 = arith.constant 0 : i32
    %c0_i32_0 = arith.constant 0 : i32
    return %c0_i32, %arg0 : i32, i32
  }
  func.func @transform_1(%arg0: i32) -> (i32, i32) {
    %c0_i32 = arith.constant 0 : i32
    %c0_i32_0 = arith.constant 0 : i32
    %c0_i32_1 = arith.constant 0 : i32
    return %c0_i32, %c0_i32_0 : i32, i32
  }
  func.func @transform_2(%arg0: i32) -> (i32, i32) {
    %c0_i32 = arith.constant 0 : i32
    %c0_i32_0 = arith.constant 0 : i32
    %c0_i32_1 = arith.constant 0 : i32
    return %c0_i32, %c0_i32_0 : i32, i32
  }
  func.func @transform_3(%arg0: i32) -> (i32, i32) {
    %c0_i32 = arith.constant 0 : i32
    %c0_i32_0 = arith.constant 0 : i32
    %c0_i32_1 = arith.constant 0 : i32
    return %c0_i32, %c0_i32_0 : i32, i32
  }
  func.func @transform_4(%arg0: i32) -> (i32, i32) {
    %c0_i32 = arith.constant 0 : i32
    %c0_i32_0 = arith.constant 0 : i32
    %c0_i32_1 = arith.constant 0 : i32
    return %c0_i32, %c0_i32_0 : i32, i32
  }
  func.func @transform_5(%arg0: i32) -> (i32, i32) {
    %c0_i32 = arith.constant 0 : i32
    %c0_i32_0 = arith.constant 0 : i32
    %c0_i32_1 = arith.constant 0 : i32
    return %c0_i32, %c0_i32_0 : i32, i32
  }
  func.func @transform_6(%arg0: i32) -> (i32, i32) {
    %c0_i32 = arith.constant 0 : i32
    %c0_i32_0 = arith.constant 0 : i32
    %c0_i32_1 = arith.constant 0 : i32
    return %c0_i32, %c0_i32_0 : i32, i32
  }
  func.func @transform_7(%arg0: i32) -> (i32, i32) {
    %c0_i32 = arith.constant 0 : i32
    %c0_i32_0 = arith.constant 0 : i32
    return %c0_i32, %arg0 : i32, i32
  }
}

</mosaic_0001>

<llo_original>
// kernel: actor_forward.1
$region0: #{actor_forward.1}
  #allocation0 [shape = 'u32[]', space=smem, size = 0x4, offset = 0x4, fixed_abs, tag = 'smem constant byte address 0x4 - core index']
  #allocation1 [shape = 'u32[72,128]{1,0:T(1,128)}', space=vmem, size = 0x9000, scoped, tag = 'internal scratch']
  %s0 = inlined_call_operand.vmem [shape: f32[1,128], index: 0, kind: input, shape index: {}]
  %s1 = inlined_call_operand.vmem [shape: f32[256,1], index: 1, kind: input, shape index: {}]
  %s2 = inlined_call_operand.vmem [shape: f32[256,1], index: 2, kind: input, shape index: {}]
  %s3 = inlined_call_operand.vmem [shape: f32[256,256], index: 3, kind: input, shape index: {}]
  %s4 = inlined_call_operand.vmem [shape: f32[256,1], index: 4, kind: input, shape index: {}]
  %s5 = inlined_call_operand.vmem [shape: f32[8,256], index: 5, kind: input, shape index: {}]
  %s6 = inlined_call_operand.vmem [shape: f32[8,1], index: 6, kind: input, shape index: {}]
  %s7 = inlined_call_operand.vmem [shape: f32[8,128], index: 7, kind: output, shape index: {}]
  %s8 = sld [smem:[#allocation0]]
  $region38: #{actor_forward.1} parent=0
    _
  %s10 = ssub.s32 1, %s8
  %s11 = scalar_select 0, %s10, %s8
  // Predicated region
  $region2: #{actor_forward.1} parent=0 // pred_check
    _
  $region3: #{actor_forward.1} parent=0 // pred_check_branch
    %13 = sbr.rel (0) target = $region5
  $region4: #{actor_forward.1} parent=0 // pred_region
    _
  $region5: #{actor_forward.1} parent=0 // pred_fallthru
    _
  // Predicated region
  $region6: #{actor_forward.1} parent=0 // pred_check
    _
  $region7: #{actor_forward.1} parent=0 // pred_check_branch
    %15 = sbr.rel (0) target = $region9
  $region8: #{actor_forward.1} parent=0 // pred_region
    _
  $region9: #{actor_forward.1} parent=0 // pred_fallthru
    _
  // Predicated region
  $region10: #{actor_forward.1} parent=0 // pred_check
    _
  $region11: #{actor_forward.1} parent=0 // pred_check_branch
    %17 = sbr.rel (0) target = $region13
  $region12: #{actor_forward.1} parent=0 // pred_region
    _
  $region13: #{actor_forward.1} parent=0 // pred_fallthru
    _
  // Predicated region
  $region14: #{actor_forward.1} parent=0 // pred_check
    _
  $region15: #{actor_forward.1} parent=0 // pred_check_branch
    %19 = sbr.rel (0) target = $region17
  $region16: #{actor_forward.1} parent=0 // pred_region
    _
  $region17: #{actor_forward.1} parent=0 // pred_fallthru
    _
  // Predicated region
  $region18: #{actor_forward.1} parent=0 // pred_check
    _
  $region19: #{actor_forward.1} parent=0 // pred_check_branch
    %21 = sbr.rel (0) target = $region21
  $region20: #{actor_forward.1} parent=0 // pred_region
    _
  $region21: #{actor_forward.1} parent=0 // pred_fallthru
    _
  // Predicated region
  $region22: #{actor_forward.1} parent=0 // pred_check
    _
  $region23: #{actor_forward.1} parent=0 // pred_check_branch
    %23 = sbr.rel (0) target = $region25
  $region24: #{actor_forward.1} parent=0 // pred_region
    _
  $region25: #{actor_forward.1} parent=0 // pred_fallthru
    _
  // Predicated region
  $region26: #{actor_forward.1} parent=0 // pred_check
    _
  $region27: #{actor_forward.1} parent=0 // pred_check_branch
    %25 = sbr.rel (0) target = $region29
  $region28: #{actor_forward.1} parent=0 // pred_region
    _
  $region29: #{actor_forward.1} parent=0 // pred_fallthru
    _
  %v26 = vld [vmem:[%s0] sm:$0x1]
  %v27 = vld [vmem:[%s1] sm:$0xff]
  %v28 = vld [vmem:[%s1 + $0x8] sm:$0xff]
  %v29 = vld [vmem:[%s1 + $0x10] sm:$0xff]
  %v30 = vld [vmem:[%s1 + $0x18] sm:$0xff]
  %v31 = vld [vmem:[%s1 + $0x20] sm:$0xff]
  %v32 = vld [vmem:[%s1 + $0x28] sm:$0xff]
  %v33 = vld [vmem:[%s1 + $0x30] sm:$0xff]
  %v34 = vld [vmem:[%s1 + $0x38] sm:$0xff]
  %v35 = vld [vmem:[%s1 + $0x40] sm:$0xff]
  %v36 = vld [vmem:[%s1 + $0x48] sm:$0xff]
  %v37 = vld [vmem:[%s1 + $0x50] sm:$0xff]
  %v38 = vld [vmem:[%s1 + $0x58] sm:$0xff]
  %v39 = vld [vmem:[%s1 + $0x60] sm:$0xff]
  %v40 = vld [vmem:[%s1 + $0x68] sm:$0xff]
  %v41 = vld [vmem:[%s1 + $0x70] sm:$0xff]
  %v42 = vld [vmem:[%s1 + $0x78] sm:$0xff]
  %v43 = vld [vmem:[%s1 + $0x80] sm:$0xff]
  %v44 = vld [vmem:[%s1 + $0x88] sm:$0xff]
  %v45 = vld [vmem:[%s1 + $0x90] sm:$0xff]
  %v46 = vld [vmem:[%s1 + $0x98] sm:$0xff]
  %v47 = vld [vmem:[%s1 + $0xa0] sm:$0xff]
  %v48 = vld [vmem:[%s1 + $0xa8] sm:$0xff]
  %v49 = vld [vmem:[%s1 + $0xb0] sm:$0xff]
  %v50 = vld [vmem:[%s1 + $0xb8] sm:$0xff]
  %v51 = vld [vmem:[%s1 + $0xc0] sm:$0xff]
  %v52 = vld [vmem:[%s1 + $0xc8] sm:$0xff]
  %v53 = vld [vmem:[%s1 + $0xd0] sm:$0xff]
  %v54 = vld [vmem:[%s1 + $0xd8] sm:$0xff]
  %v55 = vld [vmem:[%s1 + $0xe0] sm:$0xff]
  %v56 = vld [vmem:[%s1 + $0xe8] sm:$0xff]
  %v57 = vld [vmem:[%s1 + $0xf0] sm:$0xff]
  %v58 = vld [vmem:[%s1 + $0xf8] sm:$0xff]
  %60 = vset.pattern.permute.xlu0 0
  %61 = vperm.xlu0 %60, %v27
  %v62 = vpop.permute.xlu0 %61
  %65 = vset.pattern.permute.xlu0 0
  %66 = vperm.xlu0 %65, %v28
  %v67 = vpop.permute.xlu0 %66
  %70 = vset.pattern.permute.xlu0 0
  %71 = vperm.xlu0 %70, %v29
  %v72 = vpop.permute.xlu0 %71
  %75 = vset.pattern.permute.xlu0 0
  %76 = vperm.xlu0 %75, %v30
  %v77 = vpop.permute.xlu0 %76
  %80 = vset.pattern.permute.xlu0 0
  %81 = vperm.xlu0 %80, %v31
  %v82 = vpop.permute.xlu0 %81
  %85 = vset.pattern.permute.xlu0 0
  %86 = vperm.xlu0 %85, %v32
  %v87 = vpop.permute.xlu0 %86
  %90 = vset.pattern.permute.xlu0 0
  %91 = vperm.xlu0 %90, %v33
  %v92 = vpop.permute.xlu0 %91
  %95 = vset.pattern.permute.xlu0 0
  %96 = vperm.xlu0 %95, %v34
  %v97 = vpop.permute.xlu0 %96
  %100 = vset.pattern.permute.xlu0 0
  %101 = vperm.xlu0 %100, %v35
  %v102 = vpop.permute.xlu0 %101
  %105 = vset.pattern.permute.xlu0 0
  %106 = vperm.xlu0 %105, %v36
  %v107 = vpop.permute.xlu0 %106
  %110 = vset.pattern.permute.xlu0 0
  %111 = vperm.xlu0 %110, %v37
  %v112 = vpop.permute.xlu0 %111
  %115 = vset.pattern.permute.xlu0 0
  %116 = vperm.xlu0 %115, %v38
  %v117 = vpop.permute.xlu0 %116
  %120 = vset.pattern.permute.xlu0 0
  %121 = vperm.xlu0 %120, %v39
  %v122 = vpop.permute.xlu0 %121
  %125 = vset.pattern.permute.xlu0 0
  %126 = vperm.xlu0 %125, %v40
  %v127 = vpop.permute.xlu0 %126
  %130 = vset.pattern.permute.xlu0 0
  %131 = vperm.xlu0 %130, %v41
  %v132 = vpop.permute.xlu0 %131
  %135 = vset.pattern.permute.xlu0 0
  %136 = vperm.xlu0 %135, %v42
  %v137 = vpop.permute.xlu0 %136
  %140 = vset.pattern.permute.xlu0 0
  %141 = vperm.xlu0 %140, %v43
  %v142 = vpop.permute.xlu0 %141
  %145 = vset.pattern.permute.xlu0 0
  %146 = vperm.xlu0 %145, %v44
  %v147 = vpop.permute.xlu0 %146
  %150 = vset.pattern.permute.xlu0 0
  %151 = vperm.xlu0 %150, %v45
  %v152 = vpop.permute.xlu0 %151
  %155 = vset.pattern.permute.xlu0 0
  %156 = vperm.xlu0 %155, %v46
  %v157 = vpop.permute.xlu0 %156
  %160 = vset.pattern.permute.xlu0 0
  %161 = vperm.xlu0 %160, %v47
  %v162 = vpop.permute.xlu0 %161
  %165 = vset.pattern.permute.xlu0 0
  %166 = vperm.xlu0 %165, %v48
  %v167 = vpop.permute.xlu0 %166
  %170 = vset.pattern.permute.xlu0 0
  %171 = vperm.xlu0 %170, %v49
  %v172 = vpop.permute.xlu0 %171
  %175 = vset.pattern.permute.xlu0 0
  %176 = vperm.xlu0 %175, %v50
  %v177 = vpop.permute.xlu0 %176
  %180 = vset.pattern.permute.xlu0 0
  %181 = vperm.xlu0 %180, %v51
  %v182 = vpop.permute.xlu0 %181
  %185 = vset.pattern.permute.xlu0 0
  %186 = vperm.xlu0 %185, %v52
  %v187 = vpop.permute.xlu0 %186
  %190 = vset.pattern.permute.xlu0 0
  %191 = vperm.xlu0 %190, %v53
  %v192 = vpop.permute.xlu0 %191
  %195 = vset.pattern.permute.xlu0 0
  %196 = vperm.xlu0 %195, %v54
  %v197 = vpop.permute.xlu0 %196
  %200 = vset.pattern.permute.xlu0 0
  %201 = vperm.xlu0 %200, %v55
  %v202 = vpop.permute.xlu0 %201
  %205 = vset.pattern.permute.xlu0 0
  %206 = vperm.xlu0 %205, %v56
  %v207 = vpop.permute.xlu0 %206
  %210 = vset.pattern.permute.xlu0 0
  %211 = vperm.xlu0 %210, %v57
  %v212 = vpop.permute.xlu0 %211
  %215 = vset.pattern.permute.xlu0 0
  %216 = vperm.xlu0 %215, %v58
  %v217 = vpop.permute.xlu0 %216
  %v220 = vperm.slane %v26, 0
  %v222 = vmul.f32 %v62, %v220
  %v223 = vmul.f32 %v67, %v220
  %v224 = vmul.f32 %v72, %v220
  %v225 = vmul.f32 %v77, %v220
  %v226 = vmul.f32 %v82, %v220
  %v227 = vmul.f32 %v87, %v220
  %v228 = vmul.f32 %v92, %v220
  %v229 = vmul.f32 %v97, %v220
  %v230 = vmul.f32 %v102, %v220
  %v231 = vmul.f32 %v107, %v220
  %v232 = vmul.f32 %v112, %v220
  %v233 = vmul.f32 %v117, %v220
  %v234 = vmul.f32 %v122, %v220
  %v235 = vmul.f32 %v127, %v220
  %v236 = vmul.f32 %v132, %v220
  %v237 = vmul.f32 %v137, %v220
  %v238 = vmul.f32 %v142, %v220
  %v239 = vmul.f32 %v147, %v220
  %v240 = vmul.f32 %v152, %v220
  %v241 = vmul.f32 %v157, %v220
  %v242 = vmul.f32 %v162, %v220
  %v243 = vmul.f32 %v167, %v220
  %v244 = vmul.f32 %v172, %v220
  %v245 = vmul.f32 %v177, %v220
  %v246 = vmul.f32 %v182, %v220
  %v247 = vmul.f32 %v187, %v220
  %v248 = vmul.f32 %v192, %v220
  %v249 = vmul.f32 %v197, %v220
  %v250 = vmul.f32 %v202, %v220
  %v251 = vmul.f32 %v207, %v220
  %v252 = vmul.f32 %v212, %v220
  %v253 = vmul.f32 %v217, %v220
  %v254 = vld [vmem:[%s2] sm:$0xff]
  %v255 = vld [vmem:[%s2 + $0x8] sm:$0xff]
  %v256 = vld [vmem:[%s2 + $0x10] sm:$0xff]
  %v257 = vld [vmem:[%s2 + $0x18] sm:$0xff]
  %v258 = vld [vmem:[%s2 + $0x20] sm:$0xff]
  %v259 = vld [vmem:[%s2 + $0x28] sm:$0xff]
  %v260 = vld [vmem:[%s2 + $0x30] sm:$0xff]
  %v261 = vld [vmem:[%s2 + $0x38] sm:$0xff]
  %v262 = vld [vmem:[%s2 + $0x40] sm:$0xff]
  %v263 = vld [vmem:[%s2 + $0x48] sm:$0xff]
  %v264 = vld [vmem:[%s2 + $0x50] sm:$0xff]
  %v265 = vld [vmem:[%s2 + $0x58] sm:$0xff]
  %v266 = vld [vmem:[%s2 + $0x60] sm:$0xff]
  %v267 = vld [vmem:[%s2 + $0x68] sm:$0xff]
  %v268 = vld [vmem:[%s2 + $0x70] sm:$0xff]
  %v269 = vld [vmem:[%s2 + $0x78] sm:$0xff]
  %v270 = vld [vmem:[%s2 + $0x80] sm:$0xff]
  %v271 = vld [vmem:[%s2 + $0x88] sm:$0xff]
  %v272 = vld [vmem:[%s2 + $0x90] sm:$0xff]
  %v273 = vld [vmem:[%s2 + $0x98] sm:$0xff]
  %v274 = vld [vmem:[%s2 + $0xa0] sm:$0xff]
  %v275 = vld [vmem:[%s2 + $0xa8] sm:$0xff]
  %v276 = vld [vmem:[%s2 + $0xb0] sm:$0xff]
  %v277 = vld [vmem:[%s2 + $0xb8] sm:$0xff]
  %v278 = vld [vmem:[%s2 + $0xc0] sm:$0xff]
  %v279 = vld [vmem:[%s2 + $0xc8] sm:$0xff]
  %v280 = vld [vmem:[%s2 + $0xd0] sm:$0xff]
  %v281 = vld [vmem:[%s2 + $0xd8] sm:$0xff]
  %v282 = vld [vmem:[%s2 + $0xe0] sm:$0xff]
  %v283 = vld [vmem:[%s2 + $0xe8] sm:$0xff]
  %v284 = vld [vmem:[%s2 + $0xf0] sm:$0xff]
  %v285 = vld [vmem:[%s2 + $0xf8] sm:$0xff]
  %287 = vset.pattern.permute.xlu0 0
  %288 = vperm.xlu0 %287, %v254
  %v289 = vpop.permute.xlu0 %288
  %292 = vset.pattern.permute.xlu0 0
  %293 = vperm.xlu0 %292, %v255
  %v294 = vpop.permute.xlu0 %293
  %297 = vset.pattern.permute.xlu0 0
  %298 = vperm.xlu0 %297, %v256
  %v299 = vpop.permute.xlu0 %298
  %302 = vset.pattern.permute.xlu0 0
  %303 = vperm.xlu0 %302, %v257
  %v304 = vpop.permute.xlu0 %303
  %307 = vset.pattern.permute.xlu0 0
  %308 = vperm.xlu0 %307, %v258
  %v309 = vpop.permute.xlu0 %308
  %312 = vset.pattern.permute.xlu0 0
  %313 = vperm.xlu0 %312, %v259
  %v314 = vpop.permute.xlu0 %313
  %317 = vset.pattern.permute.xlu0 0
  %318 = vperm.xlu0 %317, %v260
  %v319 = vpop.permute.xlu0 %318
  %322 = vset.pattern.permute.xlu0 0
  %323 = vperm.xlu0 %322, %v261
  %v324 = vpop.permute.xlu0 %323
  %327 = vset.pattern.permute.xlu0 0
  %328 = vperm.xlu0 %327, %v262
  %v329 = vpop.permute.xlu0 %328
  %332 = vset.pattern.permute.xlu0 0
  %333 = vperm.xlu0 %332, %v263
  %v334 = vpop.permute.xlu0 %333
  %337 = vset.pattern.permute.xlu0 0
  %338 = vperm.xlu0 %337, %v264
  %v339 = vpop.permute.xlu0 %338
  %342 = vset.pattern.permute.xlu0 0
  %343 = vperm.xlu0 %342, %v265
  %v344 = vpop.permute.xlu0 %343
  %347 = vset.pattern.permute.xlu0 0
  %348 = vperm.xlu0 %347, %v266
  %v349 = vpop.permute.xlu0 %348
  %352 = vset.pattern.permute.xlu0 0
  %353 = vperm.xlu0 %352, %v267
  %v354 = vpop.permute.xlu0 %353
  %357 = vset.pattern.permute.xlu0 0
  %358 = vperm.xlu0 %357, %v268
  %v359 = vpop.permute.xlu0 %358
  %362 = vset.pattern.permute.xlu0 0
  %363 = vperm.xlu0 %362, %v269
  %v364 = vpop.permute.xlu0 %363
  %367 = vset.pattern.permute.xlu0 0
  %368 = vperm.xlu0 %367, %v270
  %v369 = vpop.permute.xlu0 %368
  %372 = vset.pattern.permute.xlu0 0
  %373 = vperm.xlu0 %372, %v271
  %v374 = vpop.permute.xlu0 %373
  %377 = vset.pattern.permute.xlu0 0
  %378 = vperm.xlu0 %377, %v272
  %v379 = vpop.permute.xlu0 %378
  %382 = vset.pattern.permute.xlu0 0
  %383 = vperm.xlu0 %382, %v273
  %v384 = vpop.permute.xlu0 %383
  %387 = vset.pattern.permute.xlu0 0
  %388 = vperm.xlu0 %387, %v274
  %v389 = vpop.permute.xlu0 %388
  %392 = vset.pattern.permute.xlu0 0
  %393 = vperm.xlu0 %392, %v275
  %v394 = vpop.permute.xlu0 %393
  %397 = vset.pattern.permute.xlu0 0
  %398 = vperm.xlu0 %397, %v276
  %v399 = vpop.permute.xlu0 %398
  %402 = vset.pattern.permute.xlu0 0
  %403 = vperm.xlu0 %402, %v277
  %v404 = vpop.permute.xlu0 %403
  %407 = vset.pattern.permute.xlu0 0
  %408 = vperm.xlu0 %407, %v278
  %v409 = vpop.permute.xlu0 %408
  %412 = vset.pattern.permute.xlu0 0
  %413 = vperm.xlu0 %412, %v279
  %v414 = vpop.permute.xlu0 %413
  %417 = vset.pattern.permute.xlu0 0
  %418 = vperm.xlu0 %417, %v280
  %v419 = vpop.permute.xlu0 %418
  %422 = vset.pattern.permute.xlu0 0
  %423 = vperm.xlu0 %422, %v281
  %v424 = vpop.permute.xlu0 %423
  %427 = vset.pattern.permute.xlu0 0
  %428 = vperm.xlu0 %427, %v282
  %v429 = vpop.permute.xlu0 %428
  %432 = vset.pattern.permute.xlu0 0
  %433 = vperm.xlu0 %432, %v283
  %v434 = vpop.permute.xlu0 %433
  %437 = vset.pattern.permute.xlu0 0
  %438 = vperm.xlu0 %437, %v284
  %v439 = vpop.permute.xlu0 %438
  %442 = vset.pattern.permute.xlu0 0
  %443 = vperm.xlu0 %442, %v285
  %v444 = vpop.permute.xlu0 %443
  %v446 = vadd.f32 %v222, %v289
  %v447 = vadd.f32 %v223, %v294
  %v448 = vadd.f32 %v224, %v299
  %v449 = vadd.f32 %v225, %v304
  %v450 = vadd.f32 %v226, %v309
  %v451 = vadd.f32 %v227, %v314
  %v452 = vadd.f32 %v228, %v319
  %v453 = vadd.f32 %v229, %v324
  %v454 = vadd.f32 %v230, %v329
  %v455 = vadd.f32 %v231, %v334
  %v456 = vadd.f32 %v232, %v339
  %v457 = vadd.f32 %v233, %v344
  %v458 = vadd.f32 %v234, %v349
  %v459 = vadd.f32 %v235, %v354
  %v460 = vadd.f32 %v236, %v359
  %v461 = vadd.f32 %v237, %v364
  %v462 = vadd.f32 %v238, %v369
  %v463 = vadd.f32 %v239, %v374
  %v464 = vadd.f32 %v240, %v379
  %v465 = vadd.f32 %v241, %v384
  %v466 = vadd.f32 %v242, %v389
  %v467 = vadd.f32 %v243, %v394
  %v468 = vadd.f32 %v244, %v399
  %v469 = vadd.f32 %v245, %v404
  %v470 = vadd.f32 %v246, %v409
  %v471 = vadd.f32 %v247, %v414
  %v472 = vadd.f32 %v248, %v419
  %v473 = vadd.f32 %v249, %v424
  %v474 = vadd.f32 %v250, %v429
  %v475 = vadd.f32 %v251, %v434
  %v476 = vadd.f32 %v252, %v439
  %v477 = vadd.f32 %v253, %v444
  %v478 = vmax.f32 %v446, 0.0
  %v479 = vmax.f32 %v447, 0.0
  %v480 = vmax.f32 %v448, 0.0
  %v481 = vmax.f32 %v449, 0.0
  %v482 = vmax.f32 %v450, 0.0
  %v483 = vmax.f32 %v451, 0.0
  %v484 = vmax.f32 %v452, 0.0
  %v485 = vmax.f32 %v453, 0.0
  %v486 = vmax.f32 %v454, 0.0
  %v487 = vmax.f32 %v455, 0.0
  %v488 = vmax.f32 %v456, 0.0
  %v489 = vmax.f32 %v457, 0.0
  %v490 = vmax.f32 %v458, 0.0
  %v491 = vmax.f32 %v459, 0.0
  %v492 = vmax.f32 %v460, 0.0
  %v493 = vmax.f32 %v461, 0.0
  %v494 = vmax.f32 %v462, 0.0
  %v495 = vmax.f32 %v463, 0.0
  %v496 = vmax.f32 %v464, 0.0
  %v497 = vmax.f32 %v465, 0.0
  %v498 = vmax.f32 %v466, 0.0
  %v499 = vmax.f32 %v467, 0.0
  %v500 = vmax.f32 %v468, 0.0
  %v501 = vmax.f32 %v469, 0.0
  %v502 = vmax.f32 %v470, 0.0
  %v503 = vmax.f32 %v471, 0.0
  %v504 = vmax.f32 %v472, 0.0
  %v505 = vmax.f32 %v473, 0.0
  %v506 = vmax.f32 %v474, 0.0
  %v507 = vmax.f32 %v475, 0.0
  %v508 = vmax.f32 %v476, 0.0
  %v509 = vmax.f32 %v477, 0.0
  %v510 = vld [vmem:[%s3] sm:$0xff]
  %v511 = vld [vmem:[%s3 + $0x8] sm:$0xff]
  %v512 = vld [vmem:[%s3 + $0x10] sm:$0xff]
  %v513 = vld [vmem:[%s3 + $0x18] sm:$0xff]
  %v514 = vld [vmem:[%s3 + $0x20] sm:$0xff]
  %v515 = vld [vmem:[%s3 + $0x28] sm:$0xff]
  %v516 = vld [vmem:[%s3 + $0x30] sm:$0xff]
  %v517 = vld [vmem:[%s3 + $0x38] sm:$0xff]
  %v518 = vld [vmem:[%s3 + $0x40] sm:$0xff]
  %v519 = vld [vmem:[%s3 + $0x48] sm:$0xff]
  %v520 = vld [vmem:[%s3 + $0x50] sm:$0xff]
  %v521 = vld [vmem:[%s3 + $0x58] sm:$0xff]
  %v522 = vld [vmem:[%s3 + $0x60] sm:$0xff]
  %v523 = vld [vmem:[%s3 + $0x68] sm:$0xff]
  %v524 = vld [vmem:[%s3 + $0x70] sm:$0xff]
  %v525 = vld [vmem:[%s3 + $0x78] sm:$0xff]
  %v526 = vld [vmem:[%s3 + $0x80] sm:$0xff]
  %v527 = vld [vmem:[%s3 + $0x88] sm:$0xff]
  %v528 = vld [vmem:[%s3 + $0x90] sm:$0xff]
  %v529 = vld [vmem:[%s3 + $0x98] sm:$0xff]
  %v530 = vld [vmem:[%s3 + $0xa0] sm:$0xff]
  %v531 = vld [vmem:[%s3 + $0xa8] sm:$0xff]
  %v532 = vld [vmem:[%s3 + $0xb0] sm:$0xff]
  %v533 = vld [vmem:[%s3 + $0xb8] sm:$0xff]
  %v534 = vld [vmem:[%s3 + $0xc0] sm:$0xff]
  %v535 = vld [vmem:[%s3 + $0xc8] sm:$0xff]
  %v536 = vld [vmem:[%s3 + $0xd0] sm:$0xff]
  %v537 = vld [vmem:[%s3 + $0xd8] sm:$0xff]
  %v538 = vld [vmem:[%s3 + $0xe0] sm:$0xff]
  %v539 = vld [vmem:[%s3 + $0xe8] sm:$0xff]
  %v540 = vld [vmem:[%s3 + $0xf0] sm:$0xff]
  %v541 = vld [vmem:[%s3 + $0xf8] sm:$0xff]
  %v542 = vld [vmem:[%s3 + $0x100] sm:$0xff]
  %v543 = vld [vmem:[%s3 + $0x108] sm:$0xff]
  %v544 = vld [vmem:[%s3 + $0x110] sm:$0xff]
  %v545 = vld [vmem:[%s3 + $0x118] sm:$0xff]
  %v546 = vld [vmem:[%s3 + $0x120] sm:$0xff]
  %v547 = vld [vmem:[%s3 + $0x128] sm:$0xff]
  %v548 = vld [vmem:[%s3 + $0x130] sm:$0xff]
  %v549 = vld [vmem:[%s3 + $0x138] sm:$0xff]
  %v550 = vld [vmem:[%s3 + $0x140] sm:$0xff]
  %v551 = vld [vmem:[%s3 + $0x148] sm:$0xff]
  %v552 = vld [vmem:[%s3 + $0x150] sm:$0xff]
  %v553 = vld [vmem:[%s3 + $0x158] sm:$0xff]
  %v554 = vld [vmem:[%s3 + $0x160] sm:$0xff]
  %v555 = vld [vmem:[%s3 + $0x168] sm:$0xff]
  %v556 = vld [vmem:[%s3 + $0x170] sm:$0xff]
  %v557 = vld [vmem:[%s3 + $0x178] sm:$0xff]
  %v558 = vld [vmem:[%s3 + $0x180] sm:$0xff]
  %v559 = vld [vmem:[%s3 + $0x188] sm:$0xff]
  %v560 = vld [vmem:[%s3 + $0x190] sm:$0xff]
  %v561 = vld [vmem:[%s3 + $0x198] sm:$0xff]
  %v562 = vld [vmem:[%s3 + $0x1a0] sm:$0xff]
  %v563 = vld [vmem:[%s3 + $0x1a8] sm:$0xff]
  %v564 = vld [vmem:[%s3 + $0x1b0] sm:$0xff]
  %v565 = vld [vmem:[%s3 + $0x1b8] sm:$0xff]
  %v566 = vld [vmem:[%s3 + $0x1c0] sm:$0xff]
  %v567 = vld [vmem:[%s3 + $0x1c8] sm:$0xff]
  %v568 = vld [vmem:[%s3 + $0x1d0] sm:$0xff]
  %v569 = vld [vmem:[%s3 + $0x1d8] sm:$0xff]
  %v570 = vld [vmem:[%s3 + $0x1e0] sm:$0xff]
  %v571 = vld [vmem:[%s3 + $0x1e8] sm:$0xff]
  %v572 = vld [vmem:[%s3 + $0x1f0] sm:$0xff]
  %v573 = vld [vmem:[%s3 + $0x1f8] sm:$0xff]
  %v574 = vld [vmem:[%s4] sm:$0xff]
  %v575 = vld [vmem:[%s4 + $0x8] sm:$0xff]
  %v576 = vld [vmem:[%s4 + $0x10] sm:$0xff]
  %v577 = vld [vmem:[%s4 + $0x18] sm:$0xff]
  %v578 = vld [vmem:[%s4 + $0x20] sm:$0xff]
  %v579 = vld [vmem:[%s4 + $0x28] sm:$0xff]
  %v580 = vld [vmem:[%s4 + $0x30] sm:$0xff]
  %v581 = vld [vmem:[%s4 + $0x38] sm:$0xff]
  %v582 = vld [vmem:[%s4 + $0x40] sm:$0xff]
  %v583 = vld [vmem:[%s4 + $0x48] sm:$0xff]
  %v584 = vld [vmem:[%s4 + $0x50] sm:$0xff]
  %v585 = vld [vmem:[%s4 + $0x58] sm:$0xff]
  %v586 = vld [vmem:[%s4 + $0x60] sm:$0xff]
  %v587 = vld [vmem:[%s4 + $0x68] sm:$0xff]
  %v588 = vld [vmem:[%s4 + $0x70] sm:$0xff]
  %v589 = vld [vmem:[%s4 + $0x78] sm:$0xff]
  %v590 = vld [vmem:[%s4 + $0x80] sm:$0xff]
  %v591 = vld [vmem:[%s4 + $0x88] sm:$0xff]
  %v592 = vld [vmem:[%s4 + $0x90] sm:$0xff]
  %v593 = vld [vmem:[%s4 + $0x98] sm:$0xff]
  %v594 = vld [vmem:[%s4 + $0xa0] sm:$0xff]
  %v595 = vld [vmem:[%s4 + $0xa8] sm:$0xff]
  %v596 = vld [vmem:[%s4 + $0xb0] sm:$0xff]
  %v597 = vld [vmem:[%s4 + $0xb8] sm:$0xff]
  %v598 = vld [vmem:[%s4 + $0xc0] sm:$0xff]
  %v599 = vld [vmem:[%s4 + $0xc8] sm:$0xff]
  %v600 = vld [vmem:[%s4 + $0xd0] sm:$0xff]
  %v601 = vld [vmem:[%s4 + $0xd8] sm:$0xff]
  %v602 = vld [vmem:[%s4 + $0xe0] sm:$0xff]
  %v603 = vld [vmem:[%s4 + $0xe8] sm:$0xff]
  %v604 = vld [vmem:[%s4 + $0xf0] sm:$0xff]
  %v605 = vld [vmem:[%s4 + $0xf8] sm:$0xff]
  %607 = vset.pattern.permute.xlu0 0
  %608 = vperm.xlu0 %607, %v574
  %v609 = vpop.permute.xlu0 %608
  %612 = vset.pattern.permute.xlu0 0
  %613 = vperm.xlu0 %612, %v575
  %v614 = vpop.permute.xlu0 %613
  %617 = vset.pattern.permute.xlu0 0
  %618 = vperm.xlu0 %617, %v576
  %v619 = vpop.permute.xlu0 %618
  %622 = vset.pattern.permute.xlu0 0
  %623 = vperm.xlu0 %622, %v577
  %v624 = vpop.permute.xlu0 %623
  %627 = vset.pattern.permute.xlu0 0
  %628 = vperm.xlu0 %627, %v578
  %v629 = vpop.permute.xlu0 %628
  %632 = vset.pattern.permute.xlu0 0
  %633 = vperm.xlu0 %632, %v579
  %v634 = vpop.permute.xlu0 %633
  %637 = vset.pattern.permute.xlu0 0
  %638 = vperm.xlu0 %637, %v580
  %v639 = vpop.permute.xlu0 %638
  %642 = vset.pattern.permute.xlu0 0
  %643 = vperm.xlu0 %642, %v581
  %v644 = vpop.permute.xlu0 %643
  %647 = vset.pattern.permute.xlu0 0
  %648 = vperm.xlu0 %647, %v582
  %v649 = vpop.permute.xlu0 %648
  %652 = vset.pattern.permute.xlu0 0
  %653 = vperm.xlu0 %652, %v583
  %v654 = vpop.permute.xlu0 %653
  %657 = vset.pattern.permute.xlu0 0
  %658 = vperm.xlu0 %657, %v584
  %v659 = vpop.permute.xlu0 %658
  %662 = vset.pattern.permute.xlu0 0
  %663 = vperm.xlu0 %662, %v585
  %v664 = vpop.permute.xlu0 %663
  %667 = vset.pattern.permute.xlu0 0
  %668 = vperm.xlu0 %667, %v586
  %v669 = vpop.permute.xlu0 %668
  %672 = vset.pattern.permute.xlu0 0
  %673 = vperm.xlu0 %672, %v587
  %v674 = vpop.permute.xlu0 %673
  %677 = vset.pattern.permute.xlu0 0
  %678 = vperm.xlu0 %677, %v588
  %v679 = vpop.permute.xlu0 %678
  %682 = vset.pattern.permute.xlu0 0
  %683 = vperm.xlu0 %682, %v589
  %v684 = vpop.permute.xlu0 %683
  %687 = vset.pattern.permute.xlu0 0
  %688 = vperm.xlu0 %687, %v590
  %v689 = vpop.permute.xlu0 %688
  %692 = vset.pattern.permute.xlu0 0
  %693 = vperm.xlu0 %692, %v591
  %v694 = vpop.permute.xlu0 %693
  %697 = vset.pattern.permute.xlu0 0
  %698 = vperm.xlu0 %697, %v592
  %v699 = vpop.permute.xlu0 %698
  %702 = vset.pattern.permute.xlu0 0
  %703 = vperm.xlu0 %702, %v593
  %v704 = vpop.permute.xlu0 %703
  %707 = vset.pattern.permute.xlu0 0
  %708 = vperm.xlu0 %707, %v594
  %v709 = vpop.permute.xlu0 %708
  %712 = vset.pattern.permute.xlu0 0
  %713 = vperm.xlu0 %712, %v595
  %v714 = vpop.permute.xlu0 %713
  %717 = vset.pattern.permute.xlu0 0
  %718 = vperm.xlu0 %717, %v596
  %v719 = vpop.permute.xlu0 %718
  %722 = vset.pattern.permute.xlu0 0
  %723 = vperm.xlu0 %722, %v597
  %v724 = vpop.permute.xlu0 %723
  %727 = vset.pattern.permute.xlu0 0
  %728 = vperm.xlu0 %727, %v598
  %v729 = vpop.permute.xlu0 %728
  %732 = vset.pattern.permute.xlu0 0
  %733 = vperm.xlu0 %732, %v599
  %v734 = vpop.permute.xlu0 %733
  %737 = vset.pattern.permute.xlu0 0
  %738 = vperm.xlu0 %737, %v600
  %v739 = vpop.permute.xlu0 %738
  %742 = vset.pattern.permute.xlu0 0
  %743 = vperm.xlu0 %742, %v601
  %v744 = vpop.permute.xlu0 %743
  %747 = vset.pattern.permute.xlu0 0
  %748 = vperm.xlu0 %747, %v602
  %v749 = vpop.permute.xlu0 %748
  %752 = vset.pattern.permute.xlu0 0
  %753 = vperm.xlu0 %752, %v603
  %v754 = vpop.permute.xlu0 %753
  %757 = vset.pattern.permute.xlu0 0
  %758 = vperm.xlu0 %757, %v604
  %v759 = vpop.permute.xlu0 %758
  %762 = vset.pattern.permute.xlu0 0
  %763 = vperm.xlu0 %762, %v605
  %v764 = vpop.permute.xlu0 %763
  %766 = vmatpush.msra.mxu0 %v493
  %767 = vmatpush.msra.mxu0 %v492
  %768 = vmatpush.msra.mxu0 %v491
  %769 = vmatpush.msra.mxu0 %v490
  %770 = vmatpush.msra.mxu0 %v489
  %771 = vmatpush.msra.mxu0 %v488
  %772 = vmatpush.msra.mxu0 %v487
  %773 = vmatpush.msra.mxu0 %v486
  %774 = vmatpush.msra.mxu0 %v485
  %775 = vmatpush.msra.mxu0 %v484
  %776 = vmatpush.msra.mxu0 %v483
  %777 = vmatpush.msra.mxu0 %v482
  %778 = vmatpush.msra.mxu0 %v481
  %779 = vmatpush.msra.mxu0 %v480
  %780 = vmatpush.msra.mxu0 %v479
  %781 = vmatpush.msra.mxu0 %v478
  %782 = vmatmul.f32.gmra.mxu0 %v510
  %v783 = vpop.f32.mrf.mxu0
  %v784 = vadd.f32 %v609, %v783
  %785 = vmatmul.f32.gmra.mxu0 %v512
  %v786 = vpop.f32.mrf.mxu0
  %v787 = vadd.f32 %v614, %v786
  %788 = vmatmul.f32.gmra.mxu0 %v514
  %v789 = vpop.f32.mrf.mxu0
  %v790 = vadd.f32 %v619, %v789
  %791 = vmatmul.f32.gmra.mxu0 %v516
  %v792 = vpop.f32.mrf.mxu0
  %v793 = vadd.f32 %v624, %v792
  %794 = vmatmul.f32.gmra.mxu0 %v518
  %v795 = vpop.f32.mrf.mxu0
  %v796 = vadd.f32 %v629, %v795
  %797 = vmatmul.f32.gmra.mxu0 %v520
  %v798 = vpop.f32.mrf.mxu0
  %v799 = vadd.f32 %v634, %v798
  %800 = vmatmul.f32.gmra.mxu0 %v522
  %v801 = vpop.f32.mrf.mxu0
  %v802 = vadd.f32 %v639, %v801
  %803 = vmatmul.f32.gmra.mxu0 %v524
  %v804 = vpop.f32.mrf.mxu0
  %v805 = vadd.f32 %v644, %v804
  %806 = vmatmul.f32.gmra.mxu0 %v526
  %v807 = vpop.f32.mrf.mxu0
  %v808 = vadd.f32 %v649, %v807
  %809 = vmatmul.f32.gmra.mxu0 %v528
  %v810 = vpop.f32.mrf.mxu0
  %v811 = vadd.f32 %v654, %v810
  %812 = vmatmul.f32.gmra.mxu0 %v530
  %v813 = vpop.f32.mrf.mxu0
  %v814 = vadd.f32 %v659, %v813
  %815 = vmatmul.f32.gmra.mxu0 %v532
  %v816 = vpop.f32.mrf.mxu0
  %v817 = vadd.f32 %v664, %v816
  %818 = vmatmul.f32.gmra.mxu0 %v534
  %v819 = vpop.f32.mrf.mxu0
  %v820 = vadd.f32 %v669, %v819
  %821 = vmatmul.f32.gmra.mxu0 %v536
  %v822 = vpop.f32.mrf.mxu0
  %v823 = vadd.f32 %v674, %v822
  %824 = vmatmul.f32.gmra.mxu0 %v538
  %v825 = vpop.f32.mrf.mxu0
  %v826 = vadd.f32 %v679, %v825
  %827 = vmatmul.f32.gmra.mxu0 %v540
  %v828 = vpop.f32.mrf.mxu0
  %v829 = vadd.f32 %v684, %v828
  %830 = vmatmul.f32.gmra.mxu0 %v542
  %v831 = vpop.f32.mrf.mxu0
  %v832 = vadd.f32 %v689, %v831
  %833 = vmatmul.f32.gmra.mxu0 %v544
  %v834 = vpop.f32.mrf.mxu0
  %v835 = vadd.f32 %v694, %v834
  %836 = vmatmul.f32.gmra.mxu0 %v546
  %v837 = vpop.f32.mrf.mxu0
  %v838 = vadd.f32 %v699, %v837
  %839 = vmatmul.f32.gmra.mxu0 %v548
  %v840 = vpop.f32.mrf.mxu0
  %v841 = vadd.f32 %v704, %v840
  %842 = vmatmul.f32.gmra.mxu0 %v550
  %v843 = vpop.f32.mrf.mxu0
  %v844 = vadd.f32 %v709, %v843
  %845 = vmatmul.f32.gmra.mxu0 %v552
  %v846 = vpop.f32.mrf.mxu0
  %v847 = vadd.f32 %v714, %v846
  %848 = vmatmul.f32.gmra.mxu0 %v554
  %v849 = vpop.f32.mrf.mxu0
  %v850 = vadd.f32 %v719, %v849
  %851 = vmatmul.f32.gmra.mxu0 %v556
  %v852 = vpop.f32.mrf.mxu0
  %v853 = vadd.f32 %v724, %v852
  %854 = vmatmul.f32.gmra.mxu0 %v558
  %v855 = vpop.f32.mrf.mxu0
  %v856 = vadd.f32 %v729, %v855
  %857 = vmatmul.f32.gmra.mxu0 %v560
  %v858 = vpop.f32.mrf.mxu0
  %v859 = vadd.f32 %v734, %v858
  %860 = vmatmul.f32.gmra.mxu0 %v562
  %v861 = vpop.f32.mrf.mxu0
  %v862 = vadd.f32 %v739, %v861
  %863 = vmatmul.f32.gmra.mxu0 %v564
  %v864 = vpop.f32.mrf.mxu0
  %v865 = vadd.f32 %v744, %v864
  %866 = vmatmul.f32.gmra.mxu0 %v566
  %v867 = vpop.f32.mrf.mxu0
  %v868 = vadd.f32 %v749, %v867
  %869 = vmatmul.f32.gmra.mxu0 %v568
  %v870 = vpop.f32.mrf.mxu0
  %v871 = vadd.f32 %v754, %v870
  %872 = vmatmul.f32.gmra.mxu0 %v570
  %v873 = vpop.f32.mrf.mxu0
  %v874 = vadd.f32 %v759, %v873
  %875 = vmatmul.f32.gmra.mxu0 %v572
  %v876 = vpop.f32.mrf.mxu0
  %v877 = vadd.f32 %v764, %v876
  %878 = vdwg.mxu0
  %879 = vmatpush.msra.mxu0 %v509
  %880 = vmatpush.msra.mxu0 %v508
  %881 = vmatpush.msra.mxu0 %v507
  %882 = vmatpush.msra.mxu0 %v506
  %883 = vmatpush.msra.mxu0 %v505
  %884 = vmatpush.msra.mxu0 %v504
  %885 = vmatpush.msra.mxu0 %v503
  %886 = vmatpush.msra.mxu0 %v502
  %887 = vmatpush.msra.mxu0 %v501
  %888 = vmatpush.msra.mxu0 %v500
  %889 = vmatpush.msra.mxu0 %v499
  %890 = vmatpush.msra.mxu0 %v498
  %891 = vmatpush.msra.mxu0 %v497
  %892 = vmatpush.msra.mxu0 %v496
  %893 = vmatpush.msra.mxu0 %v495
  %894 = vmatpush.msra.mxu0 %v494
  %895 = vmatmul.f32.gmra.mxu0 %v511
  %v896 = vpop.f32.mrf.mxu0
  %v897 = vadd.f32 %v784, %v896
  %898 = vmatmul.f32.gmra.mxu0 %v513
  %v899 = vpop.f32.mrf.mxu0
  %v900 = vadd.f32 %v787, %v899
  %901 = vmatmul.f32.gmra.mxu0 %v515
  %v902 = vpop.f32.mrf.mxu0
  %v903 = vadd.f32 %v790, %v902
  %904 = vmatmul.f32.gmra.mxu0 %v517
  %v905 = vpop.f32.mrf.mxu0
  %v906 = vadd.f32 %v793, %v905
  %907 = vmatmul.f32.gmra.mxu0 %v519
  %v908 = vpop.f32.mrf.mxu0
  %v909 = vadd.f32 %v796, %v908
  %910 = vmatmul.f32.gmra.mxu0 %v521
  %v911 = vpop.f32.mrf.mxu0
  %v912 = vadd.f32 %v799, %v911
  %913 = vmatmul.f32.gmra.mxu0 %v523
  %v914 = vpop.f32.mrf.mxu0
  %v915 = vadd.f32 %v802, %v914
  %916 = vmatmul.f32.gmra.mxu0 %v525
  %v917 = vpop.f32.mrf.mxu0
  %v918 = vadd.f32 %v805, %v917
  %919 = vmatmul.f32.gmra.mxu0 %v527
  %v920 = vpop.f32.mrf.mxu0
  %v921 = vadd.f32 %v808, %v920
  %922 = vmatmul.f32.gmra.mxu0 %v529
  %v923 = vpop.f32.mrf.mxu0
  %v924 = vadd.f32 %v811, %v923
  %925 = vmatmul.f32.gmra.mxu0 %v531
  %v926 = vpop.f32.mrf.mxu0
  %v927 = vadd.f32 %v814, %v926
  %928 = vmatmul.f32.gmra.mxu0 %v533
  %v929 = vpop.f32.mrf.mxu0
  %v930 = vadd.f32 %v817, %v929
  %931 = vmatmul.f32.gmra.mxu0 %v535
  %v932 = vpop.f32.mrf.mxu0
  %v933 = vadd.f32 %v820, %v932
  %934 = vmatmul.f32.gmra.mxu0 %v537
  %v935 = vpop.f32.mrf.mxu0
  %v936 = vadd.f32 %v823, %v935
  %937 = vmatmul.f32.gmra.mxu0 %v539
  %v938 = vpop.f32.mrf.mxu0
  %v939 = vadd.f32 %v826, %v938
  %940 = vmatmul.f32.gmra.mxu0 %v541
  %v941 = vpop.f32.mrf.mxu0
  %v942 = vadd.f32 %v829, %v941
  %943 = vmatmul.f32.gmra.mxu0 %v543
  %v944 = vpop.f32.mrf.mxu0
  %v945 = vadd.f32 %v832, %v944
  %946 = vmatmul.f32.gmra.mxu0 %v545
  %v947 = vpop.f32.mrf.mxu0
  %v948 = vadd.f32 %v835, %v947
  %949 = vmatmul.f32.gmra.mxu0 %v547
  %v950 = vpop.f32.mrf.mxu0
  %v951 = vadd.f32 %v838, %v950
  %952 = vmatmul.f32.gmra.mxu0 %v549
  %v953 = vpop.f32.mrf.mxu0
  %v954 = vadd.f32 %v841, %v953
  %955 = vmatmul.f32.gmra.mxu0 %v551
  %v956 = vpop.f32.mrf.mxu0
  %v957 = vadd.f32 %v844, %v956
  %958 = vmatmul.f32.gmra.mxu0 %v553
  %v959 = vpop.f32.mrf.mxu0
  %v960 = vadd.f32 %v847, %v959
  %961 = vmatmul.f32.gmra.mxu0 %v555
  %v962 = vpop.f32.mrf.mxu0
  %v963 = vadd.f32 %v850, %v962
  %964 = vmatmul.f32.gmra.mxu0 %v557
  %v965 = vpop.f32.mrf.mxu0
  %v966 = vadd.f32 %v853, %v965
  %967 = vmatmul.f32.gmra.mxu0 %v559
  %v968 = vpop.f32.mrf.mxu0
  %v969 = vadd.f32 %v856, %v968
  %970 = vmatmul.f32.gmra.mxu0 %v561
  %v971 = vpop.f32.mrf.mxu0
  %v972 = vadd.f32 %v859, %v971
  %973 = vmatmul.f32.gmra.mxu0 %v563
  %v974 = vpop.f32.mrf.mxu0
  %v975 = vadd.f32 %v862, %v974
  %976 = vmatmul.f32.gmra.mxu0 %v565
  %v977 = vpop.f32.mrf.mxu0
  %v978 = vadd.f32 %v865, %v977
  %979 = vmatmul.f32.gmra.mxu0 %v567
  %v980 = vpop.f32.mrf.mxu0
  %v981 = vadd.f32 %v868, %v980
  %982 = vmatmul.f32.gmra.mxu0 %v569
  %v983 = vpop.f32.mrf.mxu0
  %v984 = vadd.f32 %v871, %v983
  %985 = vmatmul.f32.gmra.mxu0 %v571
  %v986 = vpop.f32.mrf.mxu0
  %v987 = vadd.f32 %v874, %v986
  %988 = vmatmul.f32.gmra.mxu0 %v573
  %v989 = vpop.f32.mrf.mxu0
  %v990 = vadd.f32 %v877, %v989
  %991 = vdwg.mxu0
  %v992 = vmax.f32 %v897, 0.0
  %v993 = vmax.f32 %v900, 0.0
  %v994 = vmax.f32 %v903, 0.0
  %v995 = vmax.f32 %v906, 0.0
  %v996 = vmax.f32 %v909, 0.0
  %v997 = vmax.f32 %v912, 0.0
  %v998 = vmax.f32 %v915, 0.0
  %v999 = vmax.f32 %v918, 0.0
  %v1000 = vmax.f32 %v921, 0.0
  %v1001 = vmax.f32 %v924, 0.0
  %v1002 = vmax.f32 %v927, 0.0
  %v1003 = vmax.f32 %v930, 0.0
  %v1004 = vmax.f32 %v933, 0.0
  %v1005 = vmax.f32 %v936, 0.0
  %v1006 = vmax.f32 %v939, 0.0
  %v1007 = vmax.f32 %v942, 0.0
  %v1008 = vmax.f32 %v945, 0.0
  %v1009 = vmax.f32 %v948, 0.0
  %v1010 = vmax.f32 %v951, 0.0
  %v1011 = vmax.f32 %v954, 0.0
  %v1012 = vmax.f32 %v957, 0.0
  %v1013 = vmax.f32 %v960, 0.0
  %v1014 = vmax.f32 %v963, 0.0
  %v1015 = vmax.f32 %v966, 0.0
  %v1016 = vmax.f32 %v969, 0.0
  %v1017 = vmax.f32 %v972, 0.0
  %v1018 = vmax.f32 %v975, 0.0
  %v1019 = vmax.f32 %v978, 0.0
  %v1020 = vmax.f32 %v981, 0.0
  %v1021 = vmax.f32 %v984, 0.0
  %v1022 = vmax.f32 %v987, 0.0
  %v1023 = vmax.f32 %v990, 0.0
  %v1024 = vld [vmem:[%s5] sm:$0xff]
  %v1025 = vld [vmem:[%s5 + $0x8] sm:$0xff]
  %v1026 = vld [vmem:[%s6] sm:$0xff]
  %1028 = vset.pattern.permute.xlu0 0
  %1029 = vperm.xlu0 %1028, %v1026
  %v1030 = vpop.permute.xlu0 %1029
  %1032 = vmatpush.msra.mxu0 %v1007
  %1033 = vmatpush.msra.mxu0 %v1006
  %1034 = vmatpush.msra.mxu0 %v1005
  %1035 = vmatpush.msra.mxu0 %v1004
  %1036 = vmatpush.msra.mxu0 %v1003
  %1037 = vmatpush.msra.mxu0 %v1002
  %1038 = vmatpush.msra.mxu0 %v1001
  %1039 = vmatpush.msra.mxu0 %v1000
  %1040 = vmatpush.msra.mxu0 %v999
  %1041 = vmatpush.msra.mxu0 %v998
  %1042 = vmatpush.msra.mxu0 %v997
  %1043 = vmatpush.msra.mxu0 %v996
  %1044 = vmatpush.msra.mxu0 %v995
  %1045 = vmatpush.msra.mxu0 %v994
  %1046 = vmatpush.msra.mxu0 %v993
  %1047 = vmatpush.msra.mxu0 %v992
  %1048 = vmatmul.f32.gmra.mxu0 %v1024
  %v1049 = vpop.f32.mrf.mxu0
  %v1050 = vadd.f32 %v1030, %v1049
  %1051 = vdwg.mxu0
  %1052 = vmatpush.msra.mxu0 %v1023
  %1053 = vmatpush.msra.mxu0 %v1022
  %1054 = vmatpush.msra.mxu0 %v1021
  %1055 = vmatpush.msra.mxu0 %v1020
  %1056 = vmatpush.msra.mxu0 %v1019
  %1057 = vmatpush.msra.mxu0 %v1018
  %1058 = vmatpush.msra.mxu0 %v1017
  %1059 = vmatpush.msra.mxu0 %v1016
  %1060 = vmatpush.msra.mxu0 %v1015
  %1061 = vmatpush.msra.mxu0 %v1014
  %1062 = vmatpush.msra.mxu0 %v1013
  %1063 = vmatpush.msra.mxu0 %v1012
  %1064 = vmatpush.msra.mxu0 %v1011
  %1065 = vmatpush.msra.mxu0 %v1010
  %1066 = vmatpush.msra.mxu0 %v1009
  %1067 = vmatpush.msra.mxu0 %v1008
  %1068 = vmatmul.f32.gmra.mxu0 %v1025
  %v1069 = vpop.f32.mrf.mxu0
  %v1070 = vadd.f32 %v1050, %v1069
  %1071 = vdwg.mxu0
  %v1072 = vlaneseq
  %v1073 = vshrl.u32 %v1072, 7
  %vm1074 = vcmp.ge.s32.totalorder %v1073, 2
  %v1075 = vmax.f32 %v1070, 1e-06
  %v1076 = vmin.f32 %v1075, 1.0
  %v1077 = vsel %vm1074, %v1076, %v1070
  %1078 = vst [vmem:[%s7] sm:$0xff] %v1077
  // Predicated region
  $region30: #{actor_forward.1} parent=0 // pred_check
    _
  $region31: #{actor_forward.1} parent=0 // pred_check_branch
    %1080 = sbr.rel (0) target = $region33
  $region32: #{actor_forward.1} parent=0 // pred_region
    _
  $region33: #{actor_forward.1} parent=0 // pred_fallthru
    _
  // Predicated region
  $region34: #{actor_forward.1} parent=0 // pred_check
    _
  $region35: #{actor_forward.1} parent=0 // pred_check_branch
    %1082 = sbr.rel (0) target = $region37
  $region36: #{actor_forward.1} parent=0 // pred_region
    _
  $region37: #{actor_forward.1} parent=0 // pred_fallthru
    _

</llo_original>
